<compile_context>
chip_gen: v6e
topology: v6e:2x2x1
jax: 0.10.0
libtpu: 0.0.40
codegen_flags: <defaults>
</compile_context>

<pallas_src>
import math
from typing import NamedTuple

import jax
import jax.numpy as jnp
from jax.experimental import pallas as pl
from jax.experimental.pallas import tpu as pltpu

_MXU_ALIGN = 256   # fills the 2x256x256 MXU on v6e/v7x; also a multiple of 128 lanes (v5e ok)
_ROW_ALIGN = 16    # bf16 sublane packing (16 rows / vreg)


def _round_up(x, m):
    return ((x + m - 1) // m) * m


def _cdiv(a, b):
    return -(-a // b)


class MLPParams(NamedTuple):
    w1: jax.Array   # (In_p, H_p)  bf16, zero padded, pre-transposed vs torch fc.weight
    b1: jax.Array   # (1, H_p)     f32
    w2: jax.Array   # (H_p, Out_p) bf16
    b2: jax.Array   # (1, Out_p)   f32
    out_dim: int    # un-padded output feature count


def prepare_mlp_params(w1, b1, w2, b2, *, align=_MXU_ALIGN):
    """Pad + cast the weights once (not per forward call).

    w1: (In, H); b1: (H,); w2: (H, Out); b2: (Out,)  -- (in, out) layout.
    Zero padding is mathematically inert: padded hidden cols give relu(0)=0 and
    contribute 0 to fc2; padded output cols are sliced off in mlp_forward.
    """
    In, H = w1.shape
    Out = w2.shape[1]
    In_p, H_p, Out_p = (_round_up(d, align) for d in (In, H, Out))
    w1b = jnp.pad(w1.astype(jnp.bfloat16), ((0, In_p - In), (0, H_p - H)))
    w2b = jnp.pad(w2.astype(jnp.bfloat16), ((0, H_p - H), (0, Out_p - Out)))
    b1p = jnp.pad(b1.astype(jnp.float32), (0, H_p - H)).reshape(1, H_p)
    b2p = jnp.pad(b2.astype(jnp.float32), (0, Out_p - Out)).reshape(1, Out_p)
    return MLPParams(w1b, b1p, w2b, b2p, Out)


def _sigmoid(y):
    # tanh form: a single EUP transcendental per element (vs exp + reciprocal).
    return 0.5 * (jnp.tanh(0.5 * y) + 1.0)


def _mlp_resident_kernel(x_ref, w1_ref, b1_ref, w2_ref, b2_ref, o_ref):
    # Cast x to bf16 on the VPU (free under the MXU) instead of a host pre-pass.
    x = x_ref[...].astype(jnp.bfloat16)
    h = jnp.dot(x, w1_ref[...], preferred_element_type=jnp.float32)
    h = jnp.maximum(h + b1_ref[...], 0.0)
    y = jnp.dot(h.astype(jnp.bfloat16), w2_ref[...],
                preferred_element_type=jnp.float32)
    y = y + b2_ref[...]
    o_ref[...] = _sigmoid(y).astype(o_ref.dtype)


def _mlp_hidden_tiled_kernel(x_ref, w1_ref, b1_ref, w2_ref, b2_ref, o_ref, acc_ref):
    # Grid = (batch_tiles, hidden_tiles); hidden axis is a reduction into acc_ref.
    j = pl.program_id(1)

    @pl.when(j == 0)
    def _():
        acc_ref[...] = jnp.zeros_like(acc_ref)

    x = x_ref[...].astype(jnp.bfloat16)
    h = jnp.dot(x, w1_ref[...], preferred_element_type=jnp.float32)
    h = jnp.maximum(h + b1_ref[...], 0.0)
    acc_ref[...] += jnp.dot(h.astype(jnp.bfloat16), w2_ref[...],
                            preferred_element_type=jnp.float32)

    @pl.when(j == pl.num_programs(1) - 1)
    def _():
        y = acc_ref[...] + b2_ref[...]
        o_ref[...] = _sigmoid(y).astype(o_ref.dtype)


def _spec(block_shape, index_map, buffers=None):
    """BlockSpec helper; buffers=1 single-buffers VMEM-resident (constant-index) blocks."""
    if buffers is None:
        return pl.BlockSpec(block_shape, index_map)
    try:
        return pl.BlockSpec(block_shape, index_map,
                            pipeline_mode=pl.Buffered(buffers))
    except (TypeError, ValueError):
        # Fallback if this jax version does not accept pipeline_mode on BlockSpec.
        return pl.BlockSpec(block_shape, index_map)


def mlp_forward(x, params: MLPParams, *, block_rows=256, hidden_block=1024,
                max_resident_weight_bytes=16 << 20):
    """x: (B, In) in its native dtype; params from prepare_mlp_params()."""
    B, In = x.shape
    In_p, H_p = params.w1.shape
    Out_p = params.w2.shape[1]
    Out = params.out_dim
    assert In <= In_p, "x feature dim larger than prepared weights"

    out_dtype = x.dtype
    x_bytes = x.dtype.itemsize
    o_bytes = jnp.dtype(out_dtype).itemsize
    weight_bytes = (params.w1.size + params.w2.size) * 2  # bf16

    # Batch tiling: split the batch evenly into 16-row-aligned tiles so the
    # worst-case padding waste is bounded (< 16 rows per tile).
    num_tiles = max(1, _cdiv(B, block_rows))
    TM = _round_up(_cdiv(B, num_tiles), _ROW_ALIGN)
    B_p = num_tiles * TM

    # Pad x only if needed, in its native dtype (no host-side bf16 cast pass).
    if B_p != B or In_p != In:
        x_in = jnp.pad(x, ((0, B_p - B), (0, In_p - In)))
    else:
        x_in = x

    cost = pl.CostEstimate(
        flops=2 * B_p * (In_p * H_p + H_p * Out_p),
        transcendentals=B_p * Out_p,
        bytes_accessed=(x_in.size * x_bytes + weight_bytes
                        + (params.b1.size + params.b2.size) * 4
                        + B_p * Out_p * o_bytes),
    )

    resident = weight_bytes <= max_resident_weight_bytes

    if resident:
        # Weights fully VMEM-resident (single-buffered); grid only over batch.
        vmem_bytes = (2 * TM * In_p * x_bytes          # x double buffer
                      + 2 * TM * Out_p * o_bytes       # out double buffer
                      + weight_bytes                    # single-buffered bf16 weights
                      + (H_p + Out_p) * 4               # biases
                      + TM * In_p * 2                   # bf16 copy of x tile
                      + TM * H_p * (4 + 2))             # f32 h + bf16 copy for fc2
        grid_spec = pltpu.PrefetchScalarGridSpec(
            num_scalar_prefetch=0,
            grid=(num_tiles,),
            in_specs=[
                _spec((TM, In_p), lambda i: (i, 0)),                 # x (batch-tiled)
                _spec((In_p, H_p), lambda i: (0, 0), buffers=1),     # w1 resident
                _spec((1, H_p), lambda i: (0, 0), buffers=1),        # b1 resident
                _spec((H_p, Out_p), lambda i: (0, 0), buffers=1),    # w2 resident
                _spec((1, Out_p), lambda i: (0, 0), buffers=1),      # b2 resident
            ],
            out_specs=pl.BlockSpec((TM, Out_p), lambda i: (i, 0)),   # lane-dense store
        )
        kernel = _mlp_resident_kernel
        semantics = ("parallel",)
    else:
        # VMEM-aware fallback for large hidden dims (e.g. v7x's 64 MiB VMEM):
        # tile the hidden dim, accumulate fc2 partial sums in an f32 scratch.
        TH = min(_round_up(hidden_block, _MXU_ALIGN), H_p)
        while H_p % TH:
            TH -= _MXU_ALIGN
        n_h = H_p // TH
        vmem_bytes = (2 * TM * In_p * x_bytes
                      + 2 * TM * Out_p * o_bytes
                      + 2 * (In_p * TH + TH * Out_p) * 2   # double-buffered weight slabs
                      + (H_p + Out_p) * 4
                      + TM * In_p * 2
                      + TM * TH * (4 + 2)                   # f32 h slab + bf16 copy
                      + TM * Out_p * 4)                     # f32 accumulator scratch
        grid_spec = pltpu.PrefetchScalarGridSpec(
            num_scalar_prefetch=0,
            grid=(num_tiles, n_h),
            in_specs=[
                _spec((TM, In_p), lambda i, j: (i, 0)),
                _spec((In_p, TH), lambda i, j: (0, j)),
                _spec((1, TH), lambda i, j: (0, j)),
                _spec((TH, Out_p), lambda i, j: (j, 0)),
                _spec((1, Out_p), lambda i, j: (0, 0), buffers=1),
            ],
            out_specs=pl.BlockSpec((TM, Out_p), lambda i, j: (i, 0)),
            scratch_shapes=[pltpu.VMEM((TM, Out_p), jnp.float32)],
        )
        kernel = _mlp_hidden_tiled_kernel
        semantics = ("parallel", "arbitrary")

    # Real footprint (incl. the hidden intermediate), with headroom, capped so it
    # is valid on every generation (v7x physical VMEM is 64 MiB per core).
    vmem_limit = int(min(max(2 * vmem_bytes, 8 << 20), 64 << 20))

    out_padded = pl.pallas_call(
        kernel,
        out_shape=jax.ShapeDtypeStruct((B_p, Out_p), out_dtype),
        grid_spec=grid_spec,
        compiler_params=pltpu.CompilerParams(
            dimension_semantics=semantics,
            vmem_limit_bytes=vmem_limit,
        ),
        cost_estimate=cost,
    )(x_in, params.w1, params.b1, params.w2, params.b2)

    # Strip batch / output padding (dtype already matches x).
    return out_padded[:B, :Out]


def init_mlp_params(key, input_size, hidden_size, output_size, dtype=jnp.float32):
    # Deterministic init mimicking nn.Linear (uniform in +/- 1/sqrt(fan_in)),
    # stored pre-transposed ((in, out) layout) relative to PyTorch fc.weight.
    k1, k2, k3, k4 = jax.random.split(key, 4)
    bound1 = 1.0 / math.sqrt(input_size)
    bound2 = 1.0 / math.sqrt(hidden_size)
    w1 = jax.random.uniform(k1, (input_size, hidden_size), dtype, -bound1, bound1)
    b1 = jax.random.uniform(k2, (hidden_size,), dtype, -bound1, bound1)
    w2 = jax.random.uniform(k3, (hidden_size, output_size), dtype, -bound2, bound2)
    b2 = jax.random.uniform(k4, (output_size,), dtype, -bound2, bound2)
    return w1, b1, w2, b2


if __name__ == "__main__":
    key = jax.random.PRNGKey(0)
    kx, kp = jax.random.split(key)

    batch = 8
    input_size = 32
    hidden_size = 64
    output_size = 8

    x = jax.random.normal(kx, (batch, input_size), jnp.float32)
    w1, b1, w2, b2 = init_mlp_params(kp, input_size, hidden_size, output_size)

    # Weights padded + cast once (cached), not per forward call.
    params = prepare_mlp_params(w1, b1, w2, b2)

    # Reference in plain JAX f32 (same math as the PyTorch module).
    h_ref = jnp.maximum(x @ w1 + b1, 0.0)
    ref = jax.nn.sigmoid(h_ref @ w2 + b2)

    # Resident-weights path.
    out = jax.block_until_ready(mlp_forward(x, params))
    assert out.shape == (batch, output_size)
    assert jnp.allclose(out, ref, atol=2e-2, rtol=2e-2), (
        f"resident path max abs err {jnp.max(jnp.abs(out - ref))}")

    # Also exercise the hidden-tiled fallback path (forced) at small shapes.
    out_tiled = jax.block_until_ready(
        mlp_forward(x, params, max_resident_weight_bytes=0))
    assert out_tiled.shape == (batch, output_size)
    assert jnp.allclose(out_tiled, ref, atol=2e-2, rtol=2e-2), (
        f"tiled path max abs err {jnp.max(jnp.abs(out_tiled - ref))}")

    print("KERNEL_OK")
</pallas_src>

<mosaic_0001>
module attributes {stable_mosaic.version = 11 : i64} {
  func.func @_mlp_resident_kernel(%arg0: i32, %arg1: memref<16x256xf32, #tpu.memory_space<vmem>>, %arg2: memref<256x256xbf16, #tpu.memory_space<vmem>>, %arg3: memref<1x256xf32, #tpu.memory_space<vmem>>, %arg4: memref<256x256xbf16, #tpu.memory_space<vmem>>, %arg5: memref<1x256xf32, #tpu.memory_space<vmem>>, %arg6: memref<16x256xf32, #tpu.memory_space<vmem>>) attributes {dimension_semantics = [#tpu.dimension_semantics<parallel>], iteration_bounds = array<i64: 1>, scalar_prefetch = 0 : i64, scratch_operands = 0 : i64, tpu.core_type = #tpu.core_type<tc>, window_params = [{transform_indices = @transform_0, window_bounds = array<i64: 16, 256>}, {pipeline_mode = #tpu.pipeline_mode<synchronous>, transform_indices = @transform_1, window_bounds = array<i64: 256, 256>}, {pipeline_mode = #tpu.pipeline_mode<synchronous>, transform_indices = @transform_2, window_bounds = array<i64: 1, 256>}, {pipeline_mode = #tpu.pipeline_mode<synchronous>, transform_indices = @transform_3, window_bounds = array<i64: 256, 256>}, {pipeline_mode = #tpu.pipeline_mode<synchronous>, transform_indices = @transform_4, window_bounds = array<i64: 1, 256>}, {transform_indices = @transform_5, window_bounds = array<i64: 16, 256>}]} {
    %c0 = arith.constant 0 : index
    %c0_0 = arith.constant 0 : index
    %0 = vector.load %arg1[%c0, %c0_0] : memref<16x256xf32, #tpu.memory_space<vmem>>, vector<16x256xf32>
    %1 = arith.truncf %0 : vector<16x256xf32> to vector<16x256xbf16>
    %c0_1 = arith.constant 0 : index
    %c0_2 = arith.constant 0 : index
    %2 = vector.load %arg2[%c0_1, %c0_2] : memref<256x256xbf16, #tpu.memory_space<vmem>>, vector<256x256xbf16>
    %cst = arith.constant dense<0.000000e+00> : vector<16x256xf32>
    %3 = tpu.matmul %1, %2, %cst {dimension_numbers = #tpu.dot_dimension_numbers<[1], [0], [0], [1], [0, 0, 1, 1], [], []>} : vector<16x256xbf16>, vector<256x256xbf16>, vector<16x256xf32> -> vector<16x256xf32>
    %c0_3 = arith.constant 0 : index
    %c0_4 = arith.constant 0 : index
    %4 = vector.load %arg3[%c0_3, %c0_4] : memref<1x256xf32, #tpu.memory_space<vmem>>, vector<1x256xf32>
    %5 = vector.broadcast %4 : vector<1x256xf32> to vector<16x256xf32>
    %6 = arith.addf %3, %5 : vector<16x256xf32>
    %cst_5 = arith.constant 0.000000e+00 : f32
    %7 = vector.broadcast %cst_5 : f32 to vector<16x256xf32>
    %8 = arith.maximumf %6, %7 : vector<16x256xf32>
    %9 = arith.truncf %8 : vector<16x256xf32> to vector<16x256xbf16>
    %c0_6 = arith.constant 0 : index
    %c0_7 = arith.constant 0 : index
    %10 = vector.load %arg4[%c0_6, %c0_7] : memref<256x256xbf16, #tpu.memory_space<vmem>>, vector<256x256xbf16>
    %cst_8 = arith.constant dense<0.000000e+00> : vector<16x256xf32>
    %11 = tpu.matmul %9, %10, %cst_8 {dimension_numbers = #tpu.dot_dimension_numbers<[1], [0], [0], [1], [0, 0, 1, 1], [], []>} : vector<16x256xbf16>, vector<256x256xbf16>, vector<16x256xf32> -> vector<16x256xf32>
    %c0_9 = arith.constant 0 : index
    %c0_10 = arith.constant 0 : index
    %12 = vector.load %arg5[%c0_9, %c0_10] : memref<1x256xf32, #tpu.memory_space<vmem>>, vector<1x256xf32>
    %13 = vector.broadcast %12 : vector<1x256xf32> to vector<16x256xf32>
    %14 = arith.addf %11, %13 : vector<16x256xf32>
    %cst_11 = arith.constant 5.000000e-01 : f32
    %15 = vector.broadcast %cst_11 : f32 to vector<16x256xf32>
    %16 = arith.mulf %15, %14 : vector<16x256xf32>
    %17 = math.tanh %16 : vector<16x256xf32>
    %cst_12 = arith.constant 1.000000e+00 : f32
    %18 = vector.broadcast %cst_12 : f32 to vector<16x256xf32>
    %19 = arith.addf %17, %18 : vector<16x256xf32>
    %cst_13 = arith.constant 5.000000e-01 : f32
    %20 = vector.broadcast %cst_13 : f32 to vector<16x256xf32>
    %21 = arith.mulf %20, %19 : vector<16x256xf32>
    %c0_14 = arith.constant 0 : index
    %c0_15 = arith.constant 0 : index
    %22 = vector.load %arg6[%c0_14, %c0_15] : memref<16x256xf32, #tpu.memory_space<vmem>>, vector<16x256xf32>
    tpu.vector_store %arg6[%c0_14, %c0_15], %21 {strides = array<i32>} : memref<16x256xf32, #tpu.memory_space<vmem>>, vector<16x256xf32>,
    return
  }
  func.func @transform_0(%arg0: i32) -> (i32, i32) {
    %c0_i32 = arith.constant 0 : i32
    %c0_i32_0 = arith.constant 0 : i32
    return %arg0, %c0_i32 : i32, i32
  }
  func.func @transform_1(%arg0: i32) -> (i32, i32) {
    %c0_i32 = arith.constant 0 : i32
    %c0_i32_0 = arith.constant 0 : i32
    %c0_i32_1 = arith.constant 0 : i32
    return %c0_i32, %c0_i32_0 : i32, i32
  }
  func.func @transform_2(%arg0: i32) -> (i32, i32) {
    %c0_i32 = arith.constant 0 : i32
    %c0_i32_0 = arith.constant 0 : i32
    %c0_i32_1 = arith.constant 0 : i32
    return %c0_i32, %c0_i32_0 : i32, i32
  }
  func.func @transform_3(%arg0: i32) -> (i32, i32) {
    %c0_i32 = arith.constant 0 : i32
    %c0_i32_0 = arith.constant 0 : i32
    %c0_i32_1 = arith.constant 0 : i32
    return %c0_i32, %c0_i32_0 : i32, i32
  }
  func.func @transform_4(%arg0: i32) -> (i32, i32) {
    %c0_i32 = arith.constant 0 : i32
    %c0_i32_0 = arith.constant 0 : i32
    %c0_i32_1 = arith.constant 0 : i32
    return %c0_i32, %c0_i32_0 : i32, i32
  }
  func.func @transform_5(%arg0: i32) -> (i32, i32) {
    %c0_i32 = arith.constant 0 : i32
    %c0_i32_0 = arith.constant 0 : i32
    return %arg0, %c0_i32 : i32, i32
  }
}

</mosaic_0001>

<llo_original>
// kernel: tpu_custom_call.1
$region0: #{tpu_custom_call.1}
  #allocation0 [shape = 'u32[]', space=smem, size = 0x4, offset = 0x4, fixed_abs, tag = 'smem constant byte address 0x4 - core index']
  #allocation1 [shape = 'u32[144,128]{1,0:T(1,128)}', space=vmem, size = 0x12000, scoped, tag = 'internal scratch']
  %s0 = inlined_call_operand.hbm [shape: f32[16,256], index: 0, kind: input, shape index: {}]
  %s1 = inlined_call_operand.hbm [shape: bf16[256,256], index: 1, kind: input, shape index: {}]
  %s2 = inlined_call_operand.vmem [shape: f32[1,256], index: 2, kind: input, shape index: {}]
  %s3 = inlined_call_operand.hbm [shape: bf16[256,256], index: 3, kind: input, shape index: {}]
  %s4 = inlined_call_operand.vmem [shape: f32[1,256], index: 4, kind: input, shape index: {}]
  %s5 = inlined_call_operand.hbm [shape: f32[16,256], index: 5, kind: output, shape index: {}]
  %s6 = sld [smem:[#allocation0]]
  $region42: #{tpu_custom_call.1} parent=0
    _
  %s8 = ssub.s32 1, %s6
  %s9 = scalar_select 0, %s8, %s6
  $region1: #{tpu_custom_call.1} parent=0
    #allocation2 [shape = 'u8[16384]{0}', space=vmem, size = 0x4000, scoped, tag = 'input window, operand 0, single buffered']
    #allocation3 [shape = 's32[1]{0}', space=sflag, size = 0x4, scoped, tag = 'scoped memory for tpu_custom_call.1']
    #allocation4 [shape = 's32[1]{0}', space=sflag, size = 0x4, scoped, tag = 'scoped memory for tpu_custom_call.1']
    #allocation5 [shape = 'u8[131072]{0}', space=vmem, size = 0x20000, scoped, tag = 'input window, operand 1, single buffered']
    #allocation6 [shape = 's32[1]{0}', space=sflag, size = 0x4, scoped, tag = 'scoped memory for tpu_custom_call.1']
    #allocation7 [shape = 'u8[131072]{0}', space=vmem, size = 0x20000, scoped, tag = 'input window, operand 3, single buffered']
    #allocation8 [shape = 'u8[16384]{0}', space=vmem, size = 0x4000, scoped, tag = 'output window, operand 0, single buffered']
    %10 = vsyncpa [#allocation3], 0
    %11 = vsyncpa [#allocation6], 0
    %12 = vsyncpa [#allocation4], 0
    // Predicated region
    $region2: #{tpu_custom_call.1} parent=1 // pred_check
      _
    $region3: #{tpu_custom_call.1} parent=1 // pred_check_branch
      %14 = sbr.rel (0) target = $region5
    $region4: #{tpu_custom_call.1} parent=1 // pred_region
      %s16 = ssub.s32 512, 512
      %17 = vsyncadd [#allocation3], %s16
      %s18 = sshll.u32 [#allocation2], 4
      %s19 = int_to_ptr.vmem [resolvable:$true] %s18
      %24 = dma.hbm_to_vmem [thread:$0]  %s0, 512, %s19, [#allocation3], 256, 256, 16
    $region5: #{tpu_custom_call.1} parent=1 // pred_fallthru
      _
    // Predicated region
    $region6: #{tpu_custom_call.1} parent=1 // pred_check
      _
    $region7: #{tpu_custom_call.1} parent=1 // pred_check_branch
      %26 = sbr.rel (0) target = $region9
    $region8: #{tpu_custom_call.1} parent=1 // pred_region
      %s28 = ssub.s32 4096, 4096
      %29 = vsyncadd [#allocation6], %s28
      %s30 = sshll.u32 [#allocation5], 4
      %s31 = int_to_ptr.vmem [resolvable:$true] %s30
      %36 = dma.hbm_to_vmem [thread:$0]  %s1, 4096, %s31, [#allocation6], 128, 128, 8
    $region9: #{tpu_custom_call.1} parent=1 // pred_fallthru
      _
    // Predicated region
    $region10: #{tpu_custom_call.1} parent=1 // pred_check
      _
    $region11: #{tpu_custom_call.1} parent=1 // pred_check_branch
      %38 = sbr.rel (0) target = $region13
    $region12: #{tpu_custom_call.1} parent=1 // pred_region
      _
    $region13: #{tpu_custom_call.1} parent=1 // pred_fallthru
      _
    // Predicated region
    $region14: #{tpu_custom_call.1} parent=1 // pred_check
      _
    $region15: #{tpu_custom_call.1} parent=1 // pred_check_branch
      %40 = sbr.rel (0) target = $region17
    $region16: #{tpu_custom_call.1} parent=1 // pred_region
      %s42 = ssub.s32 4096, 4096
      %43 = vsyncadd [#allocation6], %s42
      %s44 = sshll.u32 [#allocation7], 4
      %s45 = int_to_ptr.vmem [resolvable:$true] %s44
      %50 = dma.hbm_to_vmem [thread:$0]  %s3, 4096, %s45, [#allocation6], 128, 128, 8
    $region17: #{tpu_custom_call.1} parent=1 // pred_fallthru
      _
    // Predicated region
    $region18: #{tpu_custom_call.1} parent=1 // pred_check
      _
    $region19: #{tpu_custom_call.1} parent=1 // pred_check_branch
      %52 = sbr.rel (0) target = $region21
    $region20: #{tpu_custom_call.1} parent=1 // pred_region
      _
    $region21: #{tpu_custom_call.1} parent=1 // pred_fallthru
      _
    // Predicated region
    $region22: #{tpu_custom_call.1} parent=1 // pred_check
      _
    $region23: #{tpu_custom_call.1} parent=1 // pred_check_branch
      %54 = sbr.rel (0) target = $region25
    $region24: #{tpu_custom_call.1} parent=1 // pred_region
      %55 = dma.done [#allocation3], 512
    $region25: #{tpu_custom_call.1} parent=1 // pred_fallthru
      _
    // Predicated region
    $region26: #{tpu_custom_call.1} parent=1 // pred_check
      _
    $region27: #{tpu_custom_call.1} parent=1 // pred_check_branch
      %57 = sbr.rel (0) target = $region29
    $region28: #{tpu_custom_call.1} parent=1 // pred_region
      %58 = dma.done [#allocation6], 4096
    $region29: #{tpu_custom_call.1} parent=1 // pred_fallthru
      _
    // Predicated region
    $region30: #{tpu_custom_call.1} parent=1 // pred_check
      _
    $region31: #{tpu_custom_call.1} parent=1 // pred_check_branch
      %60 = sbr.rel (0) target = $region33
    $region32: #{tpu_custom_call.1} parent=1 // pred_region
      %61 = dma.done [#allocation6], 4096
    $region33: #{tpu_custom_call.1} parent=1 // pred_fallthru
      _
    %v62 = vld [vmem:[#allocation2] sm:$0xff]
    %v63 = vld [vmem:[#allocation2 + $0x8] sm:$0xff]
    %v64 = vld [vmem:[#allocation2 + $0x10] sm:$0xff]
    %v65 = vld [vmem:[#allocation2 + $0x18] sm:$0xff]
    %v66 = vpack.c.bf16 %v64, %v62
    %v67 = vpack.c.bf16 %v65, %v63
    %v68 = vld [vmem:[#allocation5] sm:$0xff]
    %v69 = vld [vmem:[#allocation5 + $0x8] sm:$0xff]
    %v70 = vld [vmem:[#allocation5 + $0x10] sm:$0xff]
    %v71 = vld [vmem:[#allocation5 + $0x18] sm:$0xff]
    %v72 = vld [vmem:[#allocation5 + $0x20] sm:$0xff]
    %v73 = vld [vmem:[#allocation5 + $0x28] sm:$0xff]
    %v74 = vld [vmem:[#allocation5 + $0x30] sm:$0xff]
    %v75 = vld [vmem:[#allocation5 + $0x38] sm:$0xff]
    %v76 = vld [vmem:[#allocation5 + $0x40] sm:$0xff]
    %v77 = vld [vmem:[#allocation5 + $0x48] sm:$0xff]
    %v78 = vld [vmem:[#allocation5 + $0x50] sm:$0xff]
    %v79 = vld [vmem:[#allocation5 + $0x58] sm:$0xff]
    %v80 = vld [vmem:[#allocation5 + $0x60] sm:$0xff]
    %v81 = vld [vmem:[#allocation5 + $0x68] sm:$0xff]
    %v82 = vld [vmem:[#allocation5 + $0x70] sm:$0xff]
    %v83 = vld [vmem:[#allocation5 + $0x78] sm:$0xff]
    %v84 = vld [vmem:[#allocation5 + $0x80] sm:$0xff]
    %v85 = vld [vmem:[#allocation5 + $0x88] sm:$0xff]
    %v86 = vld [vmem:[#allocation5 + $0x90] sm:$0xff]
    %v87 = vld [vmem:[#allocation5 + $0x98] sm:$0xff]
    %v88 = vld [vmem:[#allocation5 + $0xa0] sm:$0xff]
    %v89 = vld [vmem:[#allocation5 + $0xa8] sm:$0xff]
    %v90 = vld [vmem:[#allocation5 + $0xb0] sm:$0xff]
    %v91 = vld [vmem:[#allocation5 + $0xb8] sm:$0xff]
    %v92 = vld [vmem:[#allocation5 + $0xc0] sm:$0xff]
    %v93 = vld [vmem:[#allocation5 + $0xc8] sm:$0xff]
    %v94 = vld [vmem:[#allocation5 + $0xd0] sm:$0xff]
    %v95 = vld [vmem:[#allocation5 + $0xd8] sm:$0xff]
    %v96 = vld [vmem:[#allocation5 + $0xe0] sm:$0xff]
    %v97 = vld [vmem:[#allocation5 + $0xe8] sm:$0xff]
    %v98 = vld [vmem:[#allocation5 + $0xf0] sm:$0xff]
    %v99 = vld [vmem:[#allocation5 + $0xf8] sm:$0xff]
    %v100 = vld [vmem:[%s2] sm:$0x3]
    %v102 = vlaneseq
    %v103 = vshrl.u32 %v102, 7
    %v104 = vsub.s32 0, %v103
    %v105 = vrot.slane %v100, %v104
    %v106 = vlaneseq
    %v107 = vshrl.u32 %v106, 7
    %v108 = vsub.s32 1, %v107
    %v109 = vrot.slane %v100, %v108
    %v144 = vunpack.c.l.b16 %v68
    %v145 = vunpack.c.h.b16 %v68
    %v146 = vunpack.c.l.b16 %v69
    %v147 = vunpack.c.h.b16 %v69
    %v148 = vunpack.c.l.b16 %v70
    %v149 = vunpack.c.h.b16 %v70
    %v150 = vunpack.c.l.b16 %v71
    %v151 = vunpack.c.h.b16 %v71
    %v152 = vunpack.c.l.b16 %v72
    %v153 = vunpack.c.h.b16 %v72
    %v154 = vunpack.c.l.b16 %v73
    %v155 = vunpack.c.h.b16 %v73
    %v156 = vunpack.c.l.b16 %v74
    %v157 = vunpack.c.h.b16 %v74
    %v158 = vunpack.c.l.b16 %v75
    %v159 = vunpack.c.h.b16 %v75
    %v160 = vunpack.c.l.b16 %v76
    %v161 = vunpack.c.h.b16 %v76
    %v162 = vunpack.c.l.b16 %v77
    %v163 = vunpack.c.h.b16 %v77
    %v164 = vunpack.c.l.b16 %v78
    %v165 = vunpack.c.h.b16 %v78
    %v166 = vunpack.c.l.b16 %v79
    %v167 = vunpack.c.h.b16 %v79
    %v168 = vunpack.c.l.b16 %v80
    %v169 = vunpack.c.h.b16 %v80
    %v170 = vunpack.c.l.b16 %v81
    %v171 = vunpack.c.h.b16 %v81
    %v172 = vunpack.c.l.b16 %v82
    %v173 = vunpack.c.h.b16 %v82
    %v174 = vunpack.c.l.b16 %v83
    %v175 = vunpack.c.h.b16 %v83
    %v176 = vunpack.c.l.b16 %v84
    %v177 = vunpack.c.h.b16 %v84
    %v178 = vunpack.c.l.b16 %v85
    %v179 = vunpack.c.h.b16 %v85
    %v180 = vunpack.c.l.b16 %v86
    %v181 = vunpack.c.h.b16 %v86
    %v182 = vunpack.c.l.b16 %v87
    %v183 = vunpack.c.h.b16 %v87
    %v184 = vunpack.c.l.b16 %v88
    %v185 = vunpack.c.h.b16 %v88
    %v186 = vunpack.c.l.b16 %v89
    %v187 = vunpack.c.h.b16 %v89
    %v188 = vunpack.c.l.b16 %v90
    %v189 = vunpack.c.h.b16 %v90
    %v190 = vunpack.c.l.b16 %v91
    %v191 = vunpack.c.h.b16 %v91
    %v192 = vunpack.c.l.b16 %v92
    %v193 = vunpack.c.h.b16 %v92
    %v194 = vunpack.c.l.b16 %v93
    %v195 = vunpack.c.h.b16 %v93
    %v196 = vunpack.c.l.b16 %v94
    %v197 = vunpack.c.h.b16 %v94
    %v198 = vunpack.c.l.b16 %v95
    %v199 = vunpack.c.h.b16 %v95
    %v200 = vunpack.c.l.b16 %v96
    %v201 = vunpack.c.h.b16 %v96
    %v202 = vunpack.c.l.b16 %v97
    %v203 = vunpack.c.h.b16 %v97
    %v204 = vunpack.c.l.b16 %v98
    %v205 = vunpack.c.h.b16 %v98
    %v206 = vunpack.c.l.b16 %v99
    %v207 = vunpack.c.h.b16 %v99
    %v208 = vpack.c.b16 %v146, %v144
    %v209 = vpack.c.b16 %v147, %v145
    %v210 = vpack.c.b16 %v150, %v148
    %v211 = vpack.c.b16 %v151, %v149
    %v212 = vpack.c.b16 %v154, %v152
    %v213 = vpack.c.b16 %v155, %v153
    %v214 = vpack.c.b16 %v158, %v156
    %v215 = vpack.c.b16 %v159, %v157
    %v216 = vpack.c.b16 %v162, %v160
    %v217 = vpack.c.b16 %v163, %v161
    %v218 = vpack.c.b16 %v166, %v164
    %v219 = vpack.c.b16 %v167, %v165
    %v220 = vpack.c.b16 %v170, %v168
    %v221 = vpack.c.b16 %v171, %v169
    %v222 = vpack.c.b16 %v174, %v172
    %v223 = vpack.c.b16 %v175, %v173
    %v224 = vpack.c.b16 %v178, %v176
    %v225 = vpack.c.b16 %v179, %v177
    %v226 = vpack.c.b16 %v182, %v180
    %v227 = vpack.c.b16 %v183, %v181
    %v228 = vpack.c.b16 %v186, %v184
    %v229 = vpack.c.b16 %v187, %v185
    %v230 = vpack.c.b16 %v190, %v188
    %v231 = vpack.c.b16 %v191, %v189
    %v232 = vpack.c.b16 %v194, %v192
    %v233 = vpack.c.b16 %v195, %v193
    %v234 = vpack.c.b16 %v198, %v196
    %v235 = vpack.c.b16 %v199, %v197
    %v236 = vpack.c.b16 %v202, %v200
    %v237 = vpack.c.b16 %v203, %v201
    %v238 = vpack.c.b16 %v206, %v204
    %v239 = vpack.c.b16 %v207, %v205
    %272 = vmatprep.subr.bf16.mxu0 %v223
    %273 = vmatpush1.bf16.msra.mxu0 %v222
    %274 = vmatprep.subr.bf16.mxu0 %v221
    %275 = vmatpush1.bf16.msra.mxu0 %v220
    %276 = vmatprep.subr.bf16.mxu0 %v219
    %277 = vmatpush1.bf16.msra.mxu0 %v218
    %278 = vmatprep.subr.bf16.mxu0 %v217
    %279 = vmatpush1.bf16.msra.mxu0 %v216
    %280 = vmatprep.subr.bf16.mxu0 %v215
    %281 = vmatpush1.bf16.msra.mxu0 %v214
    %282 = vmatprep.subr.bf16.mxu0 %v213
    %283 = vmatpush1.bf16.msra.mxu0 %v212
    %284 = vmatprep.subr.bf16.mxu0 %v211
    %285 = vmatpush1.bf16.msra.mxu0 %v210
    %286 = vmatprep.subr.bf16.mxu0 %v209
    %287 = vmatpush1.bf16.msra.mxu0 %v208
    %288 = vmatprep.subr.bf16.mxu0 %v239
    %289 = vmatpush2.bf16.msra.mxu0 %v238
    %290 = vmatprep.subr.bf16.mxu0 %v237
    %291 = vmatpush2.bf16.msra.mxu0 %v236
    %292 = vmatprep.subr.bf16.mxu0 %v235
    %293 = vmatpush2.bf16.msra.mxu0 %v234
    %294 = vmatprep.subr.bf16.mxu0 %v233
    %295 = vmatpush2.bf16.msra.mxu0 %v232
    %296 = vmatprep.subr.bf16.mxu0 %v231
    %297 = vmatpush2.bf16.msra.mxu0 %v230
    %298 = vmatprep.subr.bf16.mxu0 %v229
    %299 = vmatpush2.bf16.msra.mxu0 %v228
    %300 = vmatprep.subr.bf16.mxu0 %v227
    %301 = vmatpush2.bf16.msra.mxu0 %v226
    %302 = vmatprep.subr.bf16.mxu0 %v225
    %303 = vmatpush2.bf16.msra.mxu0 %v224
    %304 = vmatprep.mubr.bf16.mxu0 %v67
    %305 = vmatmul.mubr.bf16.gmra.mxu0 %v66
    %v306 = vpop.f32.mrf.mxu0
    %v307 = vadd.f32 %v105, %v306
    %v308 = vpop.f32.mrf.mxu0
    %v309 = vadd.f32 %v109, %v308
    %v310 = vpop.f32.mrf.mxu0
    %v311 = vadd.f32 %v105, %v310
    %v312 = vpop.f32.mrf.mxu0
    %v313 = vadd.f32 %v109, %v312
    %314 = vdwg.mxu0
    %v315 = vmax.f32 %v307, 0.0
    %v316 = vmax.f32 %v309, 0.0
    %v317 = vmax.f32 %v311, 0.0
    %v318 = vmax.f32 %v313, 0.0
    %v319 = vpack.c.bf16 %v317, %v315
    %v320 = vpack.c.bf16 %v318, %v316
    %v321 = vld [vmem:[#allocation7] sm:$0xff]
    %v322 = vld [vmem:[#allocation7 + $0x8] sm:$0xff]
    %v323 = vld [vmem:[#allocation7 + $0x10] sm:$0xff]
    %v324 = vld [vmem:[#allocation7 + $0x18] sm:$0xff]
    %v325 = vld [vmem:[#allocation7 + $0x20] sm:$0xff]
    %v326 = vld [vmem:[#allocation7 + $0x28] sm:$0xff]
    %v327 = vld [vmem:[#allocation7 + $0x30] sm:$0xff]
    %v328 = vld [vmem:[#allocation7 + $0x38] sm:$0xff]
    %v329 = vld [vmem:[#allocation7 + $0x40] sm:$0xff]
    %v330 = vld [vmem:[#allocation7 + $0x48] sm:$0xff]
    %v331 = vld [vmem:[#allocation7 + $0x50] sm:$0xff]
    %v332 = vld [vmem:[#allocation7 + $0x58] sm:$0xff]
    %v333 = vld [vmem:[#allocation7 + $0x60] sm:$0xff]
    %v334 = vld [vmem:[#allocation7 + $0x68] sm:$0xff]
    %v335 = vld [vmem:[#allocation7 + $0x70] sm:$0xff]
    %v336 = vld [vmem:[#allocation7 + $0x78] sm:$0xff]
    %v337 = vld [vmem:[#allocation7 + $0x80] sm:$0xff]
    %v338 = vld [vmem:[#allocation7 + $0x88] sm:$0xff]
    %v339 = vld [vmem:[#allocation7 + $0x90] sm:$0xff]
    %v340 = vld [vmem:[#allocation7 + $0x98] sm:$0xff]
    %v341 = vld [vmem:[#allocation7 + $0xa0] sm:$0xff]
    %v342 = vld [vmem:[#allocation7 + $0xa8] sm:$0xff]
    %v343 = vld [vmem:[#allocation7 + $0xb0] sm:$0xff]
    %v344 = vld [vmem:[#allocation7 + $0xb8] sm:$0xff]
    %v345 = vld [vmem:[#allocation7 + $0xc0] sm:$0xff]
    %v346 = vld [vmem:[#allocation7 + $0xc8] sm:$0xff]
    %v347 = vld [vmem:[#allocation7 + $0xd0] sm:$0xff]
    %v348 = vld [vmem:[#allocation7 + $0xd8] sm:$0xff]
    %v349 = vld [vmem:[#allocation7 + $0xe0] sm:$0xff]
    %v350 = vld [vmem:[#allocation7 + $0xe8] sm:$0xff]
    %v351 = vld [vmem:[#allocation7 + $0xf0] sm:$0xff]
    %v352 = vld [vmem:[#allocation7 + $0xf8] sm:$0xff]
    %v353 = vld [vmem:[%s4] sm:$0x3]
    %v355 = vlaneseq
    %v356 = vshrl.u32 %v355, 7
    %v357 = vsub.s32 0, %v356
    %v358 = vrot.slane %v353, %v357
    %v359 = vlaneseq
    %v360 = vshrl.u32 %v359, 7
    %v361 = vsub.s32 1, %v360
    %v362 = vrot.slane %v353, %v361
    %v397 = vunpack.c.l.b16 %v321
    %v398 = vunpack.c.h.b16 %v321
    %v399 = vunpack.c.l.b16 %v322
    %v400 = vunpack.c.h.b16 %v322
    %v401 = vunpack.c.l.b16 %v323
    %v402 = vunpack.c.h.b16 %v323
    %v403 = vunpack.c.l.b16 %v324
    %v404 = vunpack.c.h.b16 %v324
    %v405 = vunpack.c.l.b16 %v325
    %v406 = vunpack.c.h.b16 %v325
    %v407 = vunpack.c.l.b16 %v326
    %v408 = vunpack.c.h.b16 %v326
    %v409 = vunpack.c.l.b16 %v327
    %v410 = vunpack.c.h.b16 %v327
    %v411 = vunpack.c.l.b16 %v328
    %v412 = vunpack.c.h.b16 %v328
    %v413 = vunpack.c.l.b16 %v329
    %v414 = vunpack.c.h.b16 %v329
    %v415 = vunpack.c.l.b16 %v330
    %v416 = vunpack.c.h.b16 %v330
    %v417 = vunpack.c.l.b16 %v331
    %v418 = vunpack.c.h.b16 %v331
    %v419 = vunpack.c.l.b16 %v332
    %v420 = vunpack.c.h.b16 %v332
    %v421 = vunpack.c.l.b16 %v333
    %v422 = vunpack.c.h.b16 %v333
    %v423 = vunpack.c.l.b16 %v334
    %v424 = vunpack.c.h.b16 %v334
    %v425 = vunpack.c.l.b16 %v335
    %v426 = vunpack.c.h.b16 %v335
    %v427 = vunpack.c.l.b16 %v336
    %v428 = vunpack.c.h.b16 %v336
    %v429 = vunpack.c.l.b16 %v337
    %v430 = vunpack.c.h.b16 %v337
    %v431 = vunpack.c.l.b16 %v338
    %v432 = vunpack.c.h.b16 %v338
    %v433 = vunpack.c.l.b16 %v339
    %v434 = vunpack.c.h.b16 %v339
    %v435 = vunpack.c.l.b16 %v340
    %v436 = vunpack.c.h.b16 %v340
    %v437 = vunpack.c.l.b16 %v341
    %v438 = vunpack.c.h.b16 %v341
    %v439 = vunpack.c.l.b16 %v342
    %v440 = vunpack.c.h.b16 %v342
    %v441 = vunpack.c.l.b16 %v343
    %v442 = vunpack.c.h.b16 %v343
    %v443 = vunpack.c.l.b16 %v344
    %v444 = vunpack.c.h.b16 %v344
    %v445 = vunpack.c.l.b16 %v345
    %v446 = vunpack.c.h.b16 %v345
    %v447 = vunpack.c.l.b16 %v346
    %v448 = vunpack.c.h.b16 %v346
    %v449 = vunpack.c.l.b16 %v347
    %v450 = vunpack.c.h.b16 %v347
    %v451 = vunpack.c.l.b16 %v348
    %v452 = vunpack.c.h.b16 %v348
    %v453 = vunpack.c.l.b16 %v349
    %v454 = vunpack.c.h.b16 %v349
    %v455 = vunpack.c.l.b16 %v350
    %v456 = vunpack.c.h.b16 %v350
    %v457 = vunpack.c.l.b16 %v351
    %v458 = vunpack.c.h.b16 %v351
    %v459 = vunpack.c.l.b16 %v352
    %v460 = vunpack.c.h.b16 %v352
    %v461 = vpack.c.b16 %v399, %v397
    %v462 = vpack.c.b16 %v400, %v398
    %v463 = vpack.c.b16 %v403, %v401
    %v464 = vpack.c.b16 %v404, %v402
    %v465 = vpack.c.b16 %v407, %v405
    %v466 = vpack.c.b16 %v408, %v406
    %v467 = vpack.c.b16 %v411, %v409
    %v468 = vpack.c.b16 %v412, %v410
    %v469 = vpack.c.b16 %v415, %v413
    %v470 = vpack.c.b16 %v416, %v414
    %v471 = vpack.c.b16 %v419, %v417
    %v472 = vpack.c.b16 %v420, %v418
    %v473 = vpack.c.b16 %v423, %v421
    %v474 = vpack.c.b16 %v424, %v422
    %v475 = vpack.c.b16 %v427, %v425
    %v476 = vpack.c.b16 %v428, %v426
    %v477 = vpack.c.b16 %v431, %v429
    %v478 = vpack.c.b16 %v432, %v430
    %v479 = vpack.c.b16 %v435, %v433
    %v480 = vpack.c.b16 %v436, %v434
    %v481 = vpack.c.b16 %v439, %v437
    %v482 = vpack.c.b16 %v440, %v438
    %v483 = vpack.c.b16 %v443, %v441
    %v484 = vpack.c.b16 %v444, %v442
    %v485 = vpack.c.b16 %v447, %v445
    %v486 = vpack.c.b16 %v448, %v446
    %v487 = vpack.c.b16 %v451, %v449
    %v488 = vpack.c.b16 %v452, %v450
    %v489 = vpack.c.b16 %v455, %v453
    %v490 = vpack.c.b16 %v456, %v454
    %v491 = vpack.c.b16 %v459, %v457
    %v492 = vpack.c.b16 %v460, %v458
    %525 = vmatprep.subr.bf16.mxu0 %v476
    %526 = vmatpush1.bf16.msra.mxu0 %v475
    %527 = vmatprep.subr.bf16.mxu0 %v474
    %528 = vmatpush1.bf16.msra.mxu0 %v473
    %529 = vmatprep.subr.bf16.mxu0 %v472
    %530 = vmatpush1.bf16.msra.mxu0 %v471
    %531 = vmatprep.subr.bf16.mxu0 %v470
    %532 = vmatpush1.bf16.msra.mxu0 %v469
    %533 = vmatprep.subr.bf16.mxu0 %v468
    %534 = vmatpush1.bf16.msra.mxu0 %v467
    %535 = vmatprep.subr.bf16.mxu0 %v466
    %536 = vmatpush1.bf16.msra.mxu0 %v465
    %537 = vmatprep.subr.bf16.mxu0 %v464
    %538 = vmatpush1.bf16.msra.mxu0 %v463
    %539 = vmatprep.subr.bf16.mxu0 %v462
    %540 = vmatpush1.bf16.msra.mxu0 %v461
    %541 = vmatprep.subr.bf16.mxu0 %v492
    %542 = vmatpush2.bf16.msra.mxu0 %v491
    %543 = vmatprep.subr.bf16.mxu0 %v490
    %544 = vmatpush2.bf16.msra.mxu0 %v489
    %545 = vmatprep.subr.bf16.mxu0 %v488
    %546 = vmatpush2.bf16.msra.mxu0 %v487
    %547 = vmatprep.subr.bf16.mxu0 %v486
    %548 = vmatpush2.bf16.msra.mxu0 %v485
    %549 = vmatprep.subr.bf16.mxu0 %v484
    %550 = vmatpush2.bf16.msra.mxu0 %v483
    %551 = vmatprep.subr.bf16.mxu0 %v482
    %552 = vmatpush2.bf16.msra.mxu0 %v481
    %553 = vmatprep.subr.bf16.mxu0 %v480
    %554 = vmatpush2.bf16.msra.mxu0 %v479
    %555 = vmatprep.subr.bf16.mxu0 %v478
    %556 = vmatpush2.bf16.msra.mxu0 %v477
    %557 = vmatprep.mubr.bf16.mxu0 %v320
    %558 = vmatmul.mubr.bf16.gmra.mxu0 %v319
    %v559 = vpop.f32.mrf.mxu0
    %v560 = vadd.f32 %v358, %v559
    %v561 = vpop.f32.mrf.mxu0
    %v562 = vadd.f32 %v362, %v561
    %v563 = vpop.f32.mrf.mxu0
    %v564 = vadd.f32 %v358, %v563
    %v565 = vpop.f32.mrf.mxu0
    %v566 = vadd.f32 %v362, %v565
    %567 = vdwg.mxu0
    %v568 = vmul.f32 %v560, 0.5
    %v569 = vmul.f32 %v562, 0.5
    %v570 = vmul.f32 %v564, 0.5
    %v571 = vmul.f32 %v566, 0.5
    %v572 = vtanh.pop %v568
    %v573 = vtanh.pop %v569
    %v574 = vtanh.pop %v570
    %v575 = vtanh.pop %v571
    %v576 = vadd.f32 %v572, 1.0
    %v577 = vadd.f32 %v573, 1.0
    %v578 = vadd.f32 %v574, 1.0
    %v579 = vadd.f32 %v575, 1.0
    %v580 = vmul.f32 %v576, 0.5
    %v581 = vmul.f32 %v577, 0.5
    %v582 = vmul.f32 %v578, 0.5
    %v583 = vmul.f32 %v579, 0.5
    %584 = vst [vmem:[#allocation8] sm:$0xff] %v580
    %585 = vst [vmem:[#allocation8 + $0x8] sm:$0xff] %v581
    %586 = vst [vmem:[#allocation8 + $0x10] sm:$0xff] %v582
    %587 = vst [vmem:[#allocation8 + $0x18] sm:$0xff] %v583
    // Predicated region
    $region34: #{tpu_custom_call.1} parent=1 // pred_check
      _
    $region35: #{tpu_custom_call.1} parent=1 // pred_check_branch
      %589 = sbr.rel (0) target = $region37
    $region36: #{tpu_custom_call.1} parent=1 // pred_region
      %s591 = ssub.s32 512, 512
      %592 = vsyncadd [#allocation4], %s591
      %s593 = sshll.u32 [#allocation8], 4
      %s594 = int_to_ptr.vmem [resolvable:$true] %s593
      %599 = dma.vmem_to_hbm [thread:$0]  %s594, 512, %s5, [#allocation4], 256, 256, 16
    $region37: #{tpu_custom_call.1} parent=1 // pred_fallthru
      _
    // Predicated region
    $region38: #{tpu_custom_call.1} parent=1 // pred_check
      _
    $region39: #{tpu_custom_call.1} parent=1 // pred_check_branch
      %601 = sbr.rel (0) target = $region41
    $region40: #{tpu_custom_call.1} parent=1 // pred_region
      %602 = dma.done [#allocation4], 512
    $region41: #{tpu_custom_call.1} parent=1 // pred_fallthru
      _
    %603 = vsyncpa [#allocation3], 1
    %604 = vsyncpa [#allocation6], 1
    %605 = vsyncpa [#allocation4], 1

</llo_original>
